<compile_context>
chip_gen: v7x
topology: tpu7x:2x2x1
jax: 0.10.0
libtpu: 0.0.40
codegen_flags: <defaults>
</compile_context>

<pallas_src>
import jax
import jax.numpy as jnp
from jax import lax
from jax.experimental import pallas as pl
from jax.experimental.pallas import tpu as pltpu

LANES = 128
SUBLANES = 8


def _round_up(x, n):
    return ((x + n - 1) // n) * n


def _make_kernel(m, tile_rows):
    """Kernel body with static (m, tile_rows) baked in via closure."""
    need_mask = (m % tile_rows) != 0  # only the last block can be ragged

    def kernel(y_ref, yp_ref, o_ref):
        k = pl.program_id(0)

        @pl.when(k == 0)
        def _():
            o_ref[...] = jnp.zeros_like(o_ref)

        # Cast-then-subtract: math in f32 regardless of input dtype (v5e VPU
        # has no bf16 ALU; also matches the reference which upcasts first).
        e = y_ref[...].astype(jnp.float32) - yp_ref[...].astype(jnp.float32)
        e2 = e * e
        # e2 / sqrt(1 + e2) == e2 * rsqrt(1 + e2): single EUP op + VPU mul.
        val = e2 * lax.rsqrt(1.0 + e2)

        if need_mask:
            # Rows past the end of the array hold unspecified boundary-DMA
            # data; select them to exactly 0 (one VPU cmp+select per vreg,
            # free in this DMA-bound kernel).  Divisor stays the true N.
            rows_valid = m - k * tile_rows
            row_ids = lax.broadcasted_iota(jnp.int32, (tile_rows, LANES), 0)
            val = jnp.where(row_ids < rows_valid, val, 0.0)

        # VPU-only per-step reduce straight into the resident (8,128) output
        # block (1024 independent f32 accumulation lanes).
        o_ref[...] += jnp.sum(
            val.reshape(tile_rows // SUBLANES, SUBLANES, LANES), axis=0
        )

    return kernel


def algebraic_loss(y_t, y_prime_t, *, max_tile_rows=8192):
    assert y_t.shape == y_prime_t.shape, "inputs must have the same shape"
    total_n = int(y_t.size)
    assert total_n > 0
    inv_n = 1.0 / float(total_n)  # static Python reciprocal, no runtime divide

    y = y_t.reshape(-1)
    yp = y_prime_t.reshape(-1)

    m = total_n // LANES           # full 128-lane rows -> Pallas kernel
    tail = total_n - m * LANES     # < 128 leftover elements -> wrapper

    parts = []

    if m > 0:
        # Packed-sublane tiling constraint: 8 rows for 32-bit, 16 for 16-bit,
        # 32 for 8-bit inputs.
        itemsize = min(y.dtype.itemsize, yp.dtype.itemsize)
        sub = max(SUBLANES, 32 // max(1, itemsize))
        tile_rows = max(sub, min(_round_up(max_tile_rows, sub),
                                 _round_up(m, sub)))
        steps = pl.cdiv(m, tile_rows)

        # Zero-copy reshape when N % 128 == 0; otherwise slice off the tail.
        y2d = (y if tail == 0 else y[: m * LANES]).reshape(m, LANES)
        yp2d = (yp if tail == 0 else yp[: m * LANES]).reshape(m, LANES)

        cost = pl.CostEstimate(
            flops=5 * m * LANES,
            transcendentals=m * LANES,
            bytes_accessed=m * LANES * (y.dtype.itemsize + yp.dtype.itemsize)
            + SUBLANES * LANES * 4,
        )

        partials = pl.pallas_call(
            _make_kernel(m, tile_rows),
            out_shape=jax.ShapeDtypeStruct((SUBLANES, LANES), jnp.float32),
            grid_spec=pltpu.PrefetchScalarGridSpec(
                num_scalar_prefetch=0,
                grid=(steps,),
                in_specs=[
                    pl.BlockSpec((tile_rows, LANES), lambda k: (k, 0)),
                    pl.BlockSpec((tile_rows, LANES), lambda k: (k, 0)),
                ],
                out_specs=pl.BlockSpec((SUBLANES, LANES), lambda k: (0, 0)),
            ),
            compiler_params=pltpu.CompilerParams(
                dimension_semantics=("arbitrary",),
                # 2 inputs x 2 double-buffers x 4 MiB (f32, 8192 rows) = 16 MiB
                # -- raise scoped VMEM so this also fits v5e's 16 MiB default.
                vmem_limit_bytes=40 * 1024 * 1024,
            ),
            cost_estimate=cost,
        )(y2d, yp2d)
        parts.append(jnp.sum(partials))

    if tail:
        # < 128-element ragged tail: trivial wrapper reduce (avoids a full
        # jnp.pad copy of both inputs just to round N up to 128).
        et = (y[m * LANES:].astype(jnp.float32)
              - yp[m * LANES:].astype(jnp.float32))
        e2t = et * et
        parts.append(jnp.sum(e2t * lax.rsqrt(1.0 + e2t)))

    total = parts[0]
    for p in parts[1:]:
        total = total + p
    return total * jnp.float32(inv_n)


def _reference(y_t, y_prime_t):
    e = y_t.astype(jnp.float32) - y_prime_t.astype(jnp.float32)
    return jnp.mean(e * e / jnp.sqrt(1.0 + e * e))


if __name__ == "__main__":
    key = jax.random.PRNGKey(0)
    k1, k2 = jax.random.split(key)
    # Small NCHW-like shapes: batch=2, channels=4, spatial=16x16
    shape = (2, 4, 16, 16)
    y_t = jax.random.normal(k1, shape, dtype=jnp.float32)
    y_prime_t = jax.random.normal(k2, shape, dtype=jnp.float32)

    loss = algebraic_loss(y_t, y_prime_t)
    jax.block_until_ready(loss)

    ref = _reference(y_t, y_prime_t)
    assert jnp.allclose(loss, ref, rtol=1e-5, atol=1e-6), (loss, ref)

    print("KERNEL_OK")
</pallas_src>

<mosaic_0001>
module attributes {stable_mosaic.version = 11 : i64} {
  func.func @kernel(%arg0: i32, %arg1: memref<16x128xf32, #tpu.memory_space<vmem>>, %arg2: memref<16x128xf32, #tpu.memory_space<vmem>>, %arg3: memref<8x128xf32, #tpu.memory_space<vmem>>) attributes {dimension_semantics = [#tpu.dimension_semantics<arbitrary>], iteration_bounds = array<i64: 1>, scalar_prefetch = 0 : i64, scratch_operands = 0 : i64, tpu.core_type = #tpu.core_type<tc>, window_params = [{transform_indices = @transform_0, window_bounds = array<i64: 16, 128>}, {transform_indices = @transform_1, window_bounds = array<i64: 16, 128>}, {pipeline_mode = #tpu.pipeline_mode<synchronous>, transform_indices = @transform_2, window_bounds = array<i64: 8, 128>}]} {
    %c0_i32 = arith.constant 0 : i32
    %0 = arith.cmpi eq, %arg0, %c0_i32 : i32
    %1 = arith.extui %0 : i1 to i32
    %c0_i32_0 = arith.constant 0 : i32
    %2 = arith.cmpi ne, %1, %c0_i32_0 : i32
    scf.if %2 {
      %cst_9 = arith.constant 0.000000e+00 : f32
      %16 = vector.broadcast %cst_9 : f32 to vector<8x128xf32>
      %c0_10 = arith.constant 0 : index
      %c0_11 = arith.constant 0 : index
      %17 = vector.load %arg3[%c0_10, %c0_11] : memref<8x128xf32, #tpu.memory_space<vmem>>, vector<8x128xf32>
      tpu.vector_store %arg3[%c0_10, %c0_11], %16 {strides = array<i32>} : memref<8x128xf32, #tpu.memory_space<vmem>>, vector<8x128xf32>,
    } else {
    }
    %c0 = arith.constant 0 : index
    %c0_1 = arith.constant 0 : index
    %3 = vector.load %arg1[%c0, %c0_1] : memref<16x128xf32, #tpu.memory_space<vmem>>, vector<16x128xf32>
    %c0_2 = arith.constant 0 : index
    %c0_3 = arith.constant 0 : index
    %4 = vector.load %arg2[%c0_2, %c0_3] : memref<16x128xf32, #tpu.memory_space<vmem>>, vector<16x128xf32>
    %5 = arith.subf %3, %4 : vector<16x128xf32>
    %6 = arith.mulf %5, %5 : vector<16x128xf32>
    %cst = arith.constant 1.000000e+00 : f32
    %7 = vector.broadcast %cst : f32 to vector<16x128xf32>
    %8 = arith.addf %7, %6 : vector<16x128xf32>
    %9 = math.rsqrt %8 : vector<16x128xf32>
    %10 = arith.mulf %6, %9 : vector<16x128xf32>
    %c0_4 = arith.constant 0 : index
    %c0_5 = arith.constant 0 : index
    %11 = vector.load %arg3[%c0_4, %c0_5] : memref<8x128xf32, #tpu.memory_space<vmem>>, vector<8x128xf32>
    %12 = vector.shape_cast %10 : vector<16x128xf32> to vector<2x8x128xf32>
    %cst_6 = arith.constant dense<0.000000e+00> : vector<8x128xf32>
    %13 = vector.multi_reduction <add>, %12, %cst_6 [0] : vector<2x8x128xf32> to vector<8x128xf32>
    %14 = arith.addf %11, %13 : vector<8x128xf32>
    %c0_7 = arith.constant 0 : index
    %c0_8 = arith.constant 0 : index
    %15 = vector.load %arg3[%c0_7, %c0_8] : memref<8x128xf32, #tpu.memory_space<vmem>>, vector<8x128xf32>
    tpu.vector_store %arg3[%c0_7, %c0_8], %14 {strides = array<i32>} : memref<8x128xf32, #tpu.memory_space<vmem>>, vector<8x128xf32>,
    return
  }
  func.func @transform_0(%arg0: i32) -> (i32, i32) {
    %c0_i32 = arith.constant 0 : i32
    %c0_i32_0 = arith.constant 0 : i32
    return %arg0, %c0_i32 : i32, i32
  }
  func.func @transform_1(%arg0: i32) -> (i32, i32) {
    %c0_i32 = arith.constant 0 : i32
    %c0_i32_0 = arith.constant 0 : i32
    return %arg0, %c0_i32 : i32, i32
  }
  func.func @transform_2(%arg0: i32) -> (i32, i32) {
    %c0_i32 = arith.constant 0 : i32
    %c0_i32_0 = arith.constant 0 : i32
    %c0_i32_1 = arith.constant 0 : i32
    return %c0_i32, %c0_i32_0 : i32, i32
  }
}

</mosaic_0001>

<llo_original>
// kernel: tpu_custom_call.1
$region0: #{tpu_custom_call.1}
  #allocation0 [shape = 'u32[]', space=smem, size = 0x4, offset = 0x4, fixed_abs, tag = 'smem constant byte address 0x4 - core index']
  #allocation1 [shape = 'u32[144,128]{1,0:T(1,128)}', space=vmem, size = 0x12000, scoped, tag = 'internal scratch']
  %s0 = inlined_call_operand.hbm [shape: f32[16,128], index: 0, kind: input, shape index: {}]
  %s1 = inlined_call_operand.hbm [shape: f32[16,128], index: 1, kind: input, shape index: {}]
  %s2 = inlined_call_operand.hbm [shape: f32[8,128], index: 2, kind: output, shape index: {}]
  %s3 = sld [smem:[#allocation0]]
  $region30: #{tpu_custom_call.1} parent=0
    _
  %s5 = ssub.s32 1, %s3
  %s6 = scalar_select 0, %s5, %s3
  $region1: #{tpu_custom_call.1} parent=0
    #allocation2 [shape = 'u8[8192]{0}', space=vmem, size = 0x2000, scoped, tag = 'input window, operand 0, single buffered']
    #allocation3 [shape = 's32[1]{0}', space=sflag, size = 0x4, scoped, tag = 'scoped memory for tpu_custom_call.1']
    #allocation4 [shape = 's32[1]{0}', space=sflag, size = 0x4, scoped, tag = 'scoped memory for tpu_custom_call.1']
    #allocation5 [shape = 'u8[8192]{0}', space=vmem, size = 0x2000, scoped, tag = 'input window, operand 1, single buffered']
    #allocation6 [shape = 's32[1]{0}', space=sflag, size = 0x4, scoped, tag = 'scoped memory for tpu_custom_call.1']
    #allocation7 [shape = 'u8[4096]{0}', space=vmem, size = 0x1000, scoped, tag = 'output window, operand 0, single buffered']
    %7 = vsyncpa [#allocation3], 0
    %8 = vsyncpa [#allocation6], 0
    %9 = vsyncpa [#allocation4], 0
    // Predicated region
    $region2: #{tpu_custom_call.1} parent=1 // pred_check
      _
    $region3: #{tpu_custom_call.1} parent=1 // pred_check_branch
      %11 = sbr.rel (0) target = $region5
    $region4: #{tpu_custom_call.1} parent=1 // pred_region
      %s13 = ssub.s32 256, 256
      %14 = vsyncadd [#allocation3], %s13
      %s15 = sshll.u32 [#allocation2], 4
      %s16 = int_to_ptr.vmem [resolvable:$true] %s15
      %21 = dma.hbm_to_vmem [thread:$0]  %s0, 256, %s16, [#allocation3], 128, 128, 8
    $region5: #{tpu_custom_call.1} parent=1 // pred_fallthru
      _
    // Predicated region
    $region6: #{tpu_custom_call.1} parent=1 // pred_check
      _
    $region7: #{tpu_custom_call.1} parent=1 // pred_check_branch
      %23 = sbr.rel (0) target = $region9
    $region8: #{tpu_custom_call.1} parent=1 // pred_region
      %s25 = ssub.s32 256, 256
      %26 = vsyncadd [#allocation6], %s25
      %s27 = sshll.u32 [#allocation5], 4
      %s28 = int_to_ptr.vmem [resolvable:$true] %s27
      %33 = dma.hbm_to_vmem [thread:$0]  %s1, 256, %s28, [#allocation6], 128, 128, 8
    $region9: #{tpu_custom_call.1} parent=1 // pred_fallthru
      _
    // Predicated region
    $region10: #{tpu_custom_call.1} parent=1 // pred_check
      _
    $region11: #{tpu_custom_call.1} parent=1 // pred_check_branch
      %35 = sbr.rel (0) target = $region13
    $region12: #{tpu_custom_call.1} parent=1 // pred_region
      %36 = dma.done [#allocation3], 256
    $region13: #{tpu_custom_call.1} parent=1 // pred_fallthru
      _
    // Predicated region
    $region14: #{tpu_custom_call.1} parent=1 // pred_check
      _
    $region15: #{tpu_custom_call.1} parent=1 // pred_check_branch
      %38 = sbr.rel (0) target = $region17
    $region16: #{tpu_custom_call.1} parent=1 // pred_region
      %39 = dma.done [#allocation6], 256
    $region17: #{tpu_custom_call.1} parent=1 // pred_fallthru
      _
    %p40 = scmp.eq.s32.totalorder 0, 0
    // Predicated region
    $region18: #{tpu_custom_call.1} parent=1 // pred_check
      %p41 = pneg %p40
    $region19: #{tpu_custom_call.1} parent=1 // pred_check_branch
      %43 = sbr.rel (%p41) target = $region21
    $region20: #{tpu_custom_call.1} parent=1 // pred_region
      %44 = vst [vmem:[#allocation7] sm:$0xff] 0.0
    $region21: #{tpu_custom_call.1} parent=1 // pred_fallthru
      _
    %v45 = vld [vmem:[#allocation2] sm:$0xff]
    %v46 = vld [vmem:[#allocation2 + $0x8] sm:$0xff]
    %v47 = vld [vmem:[#allocation5] sm:$0xff]
    %v48 = vld [vmem:[#allocation5 + $0x8] sm:$0xff]
    %v49 = vsub.f32 %v45, %v47
    %v50 = vsub.f32 %v46, %v48
    %v51 = vmul.f32 %v49, %v49
    %v52 = vmul.f32 %v50, %v50
    %v53 = vadd.f32 %v51, 1.0
    %v54 = vadd.f32 %v52, 1.0
    %v55 = vrsqrt.pop %v53
    %v56 = vrsqrt.pop %v54
    %v57 = vmul.f32 %v51, %v55
    %v58 = vmul.f32 %v52, %v56
    %v59 = vld [vmem:[#allocation7] sm:$0xff]
    %v60 = vadd.f32 %v57, %v58
    %v61 = vadd.f32 %v59, %v60
    %62 = vst [vmem:[#allocation7] sm:$0xff] %v61
    // Predicated region
    $region22: #{tpu_custom_call.1} parent=1 // pred_check
      _
    $region23: #{tpu_custom_call.1} parent=1 // pred_check_branch
      %64 = sbr.rel (0) target = $region25
    $region24: #{tpu_custom_call.1} parent=1 // pred_region
      %s66 = ssub.s32 128, 128
      %67 = vsyncadd [#allocation4], %s66
      %s69 = sshll.u32 [#allocation7], 4
      %s70 = int_to_ptr.vmem [resolvable:$true] %s69
      %72 = dma.vmem_to_hbm [thread:$0]  %s70, 128, %s2, [#allocation4]
    $region25: #{tpu_custom_call.1} parent=1 // pred_fallthru
      _
    // Predicated region
    $region26: #{tpu_custom_call.1} parent=1 // pred_check
      _
    $region27: #{tpu_custom_call.1} parent=1 // pred_check_branch
      %74 = sbr.rel (0) target = $region29
    $region28: #{tpu_custom_call.1} parent=1 // pred_region
      %75 = dma.done [#allocation4], 128
    $region29: #{tpu_custom_call.1} parent=1 // pred_fallthru
      _
    %76 = vsyncpa [#allocation3], 1
    %77 = vsyncpa [#allocation6], 1
    %78 = vsyncpa [#allocation4], 1

</llo_original>
